<compile_context>
chip_gen: v7x
topology: tpu7x:2x2x1
jax: 0.10.0
libtpu: 0.0.40
codegen_flags: <defaults>
</compile_context>

<pallas_src>
import functools

import jax
import jax.numpy as jnp
from jax.experimental import pallas as pl
from jax.experimental.pallas import tpu as pltpu


def _soft_attention_pool_kernel(x_ref, w1_ref, b1_ref, w2_ref,
                                out_ref,
                                m_scr, l_scr, acc_scr,
                                *, n_total, l_total):
    # x_ref:  (TB, C, TL)  native dtype
    # w1_ref: (M, C) in x dtype, b1_ref: (M, 1) f32, w2_ref: (M, 1) f32
    # out_ref: (TB, C) f32  (written only on the last L step)
    # scratch: m_scr (TB,1), l_scr (TB,1), acc_scr (TB,C)  f32
    bi = pl.program_id(0)
    li = pl.program_id(1)
    tb, c, tl = x_ref.shape

    @pl.when(li == 0)
    def _init():
        m_scr[...] = jnp.full_like(m_scr, -jnp.inf)
        l_scr[...] = jnp.zeros_like(l_scr)
        acc_scr[...] = jnp.zeros_like(acc_scr)

    x = x_ref[...]                                   # (TB, C, TL), native dtype

    # ---- ragged-tail masking (static flags: zero cost for aligned shapes) --
    need_l_mask = (l_total % tl) != 0                # partial last L tile
    need_b_mask = (n_total % tb) != 0                # partial last batch tile
    lane_ok = None
    if need_l_mask:
        lane_pos = li * tl + jax.lax.broadcasted_iota(jnp.int32, (1, tl), 1)
        lane_ok = lane_pos < l_total                 # (1, TL) -> masks logits
    if need_l_mask or need_b_mask:
        mask2 = lane_ok
        if need_b_mask:
            row_pos = bi * tb + jax.lax.broadcasted_iota(jnp.int32, (tb, 1), 0)
            row_ok = row_pos < n_total               # (TB, 1)
            mask2 = row_ok if mask2 is None else (row_ok & mask2)
        # Zero-fill invalid x so no garbage/NaN reaches the matmul or the
        # weighted sum (stays in x's native dtype).
        x = jnp.where(mask2[:, None, :], x, jnp.zeros((), x.dtype))

    w1 = w1_ref[...]                                 # (M, C)  x dtype
    b1 = b1_ref[...]                                 # (M, 1)  f32 (hoisted once)
    w2 = w2_ref[...]                                 # (M, 1)  f32

    # First 1x1 conv (C -> M): TB small 2-D MXU matmuls, weights stationary
    # (no broadcast_to / batched einsum).  Second conv (M -> 1): VPU multiply
    # + sublane reduce over the tiny M axis.
    s_rows = []
    for b in range(tb):                              # static unroll, TB <= 8
        hb = jnp.dot(w1, x[b], preferred_element_type=jnp.float32)   # (M, TL)
        hb = jnp.tanh(hb + b1)                                        # EUP
        s_rows.append(jnp.sum(hb * w2, axis=0, keepdims=True))        # (1, TL)
    s = s_rows[0] if tb == 1 else jnp.concatenate(s_rows, axis=0)     # (TB, TL)

    if need_l_mask:
        s = jnp.where(lane_ok, s, -jnp.inf)          # L-tail logits -> -inf

    # ---- online (streaming) softmax over the L axis ----
    m_prev = m_scr[...]                              # (TB, 1)
    m_new = jnp.maximum(m_prev, jnp.max(s, axis=-1, keepdims=True))
    alpha = jnp.exp(m_prev - m_new)                  # (TB, 1)
    p = jnp.exp(s - m_new)                           # (TB, TL); 0 on the tail
    l_scr[...] = alpha * l_scr[...] + jnp.sum(p, axis=-1, keepdims=True)
    # Weighted-sum contribution: sum_l x[b,c,l] * p[b,l]  (VPU mul + lane
    # reduce); x stays native, the upcast fuses into the multiply.
    contrib = jnp.sum(x * p[:, None, :], axis=-1)    # (TB, C) f32
    acc_scr[...] = alpha * acc_scr[...] + contrib
    m_scr[...] = m_new

    @pl.when(li == pl.num_programs(1) - 1)
    def _finalize():
        # Exact division: runs once per batch block, precision > approx EUP.
        out_ref[...] = (acc_scr[...] / l_scr[...]).astype(out_ref.dtype)


def _vmem_capacity_bytes():
    try:
        return int(pltpu.get_tpu_info().vmem_capacity_bytes)
    except Exception:
        return 64 << 20          # conservative default (v7x per-TC VMEM)


def _round_up(v, mult):
    return ((v + mult - 1) // mult) * mult


def _pick_l_tile(l_total, tb, c, itemsize, big_vmem):
    """Fixed lane tile (multiple of 128), independent of L's divisors; the
    ragged tail is masked in-kernel.  Capped so the double-buffered x block
    fits the per-generation VMEM budget."""
    target = 1024 if big_vmem else 512
    byte_cap = (16 << 20) if big_vmem else (6 << 20)   # 2x (TB,C,TL) budget
    cap_elems = byte_cap // max(1, 2 * tb * c * itemsize)
    cap = max(128, (cap_elems // 128) * 128)
    tl = min(target, cap, _round_up(l_total, 128))
    return max(128, tl)


def soft_attention_pooling(x, w1, b1, w2, b2):
    """x: (N, C, *spatial). Returns (N, C) float32 (matches the torch module)."""
    n, c = x.shape[0], x.shape[1]
    x3 = x.reshape(n, c, -1)
    if not jnp.issubdtype(x3.dtype, jnp.floating):
        x3 = x3.astype(jnp.float32)
    l_total = x3.shape[-1]
    m = w1.shape[0]
    itemsize = x3.dtype.itemsize

    # w1 in x's dtype -> native MXU path (bf16 stays bf16); b1/w2 stay f32
    # (applied after the f32-accumulated matmul).
    w1m = w1.reshape(m, c).astype(x3.dtype)        # Conv1d (M, C, 1) -> (M, C)
    b1m = b1.reshape(m, 1).astype(jnp.float32)     # (M,)       -> (M, 1)
    w2m = w2.reshape(m, 1).astype(jnp.float32)     # (1, M, 1)  -> (M, 1)
    del b2   # constant shift of the logits; cancels in softmax

    # Batch tile: 8 rows/step (sublane-dense output, amortized per-step
    # overhead); full N when N < 8 so the (tb, C) out block stays legal.
    tb = 8 if n >= 8 else n
    grid_b = pl.cdiv(n, tb)              # ragged batch tail masked in-kernel

    big_vmem = _vmem_capacity_bytes() >= (96 << 20)   # v5e/v6e: 128 MiB VMEM
    tl = _pick_l_tile(l_total, tb, c, itemsize, big_vmem)
    grid_l = pl.cdiv(l_total, tl)        # ragged L tail masked in-kernel

    flops = 2 * n * l_total * m * c + 2 * n * l_total * m + 2 * n * l_total * c
    transcendentals = n * l_total * (m + 1)
    bytes_accessed = (x3.size * itemsize + n * c * 4
                      + m * c * itemsize + 2 * m * 4)

    # VMEM budget: double-buffered x block + weights + scratch + temporaries,
    # generation-aware ceiling (96 MiB on 128-MiB chips, 48 MiB on v7x).
    est = (2 * tb * c * tl * itemsize          # x double buffer
           + 2 * tb * c * 4                    # out double buffer
           + 2 * (m * c * itemsize + 2 * m * 4)
           + tb * (c + 2) * 4                  # scratch
           + 4 * tb * tl * 4)                  # in-flight (TB, TL) temporaries
    ceiling = (96 << 20) if big_vmem else (48 << 20)
    vmem_limit = int(min(ceiling, max(32 << 20, 4 * est)))

    kernel = functools.partial(_soft_attention_pool_kernel,
                               n_total=n, l_total=l_total)

    out = pl.pallas_call(
        kernel,
        out_shape=jax.ShapeDtypeStruct((n, c), jnp.float32),
        grid_spec=pltpu.PrefetchScalarGridSpec(
            num_scalar_prefetch=0,
            grid=(grid_b, grid_l),
            in_specs=[
                pl.BlockSpec((tb, c, tl), lambda b, l: (b, 0, l)),
                pl.BlockSpec((m, c), lambda b, l: (0, 0)),
                pl.BlockSpec((m, 1), lambda b, l: (0, 0)),
                pl.BlockSpec((m, 1), lambda b, l: (0, 0)),
            ],
            out_specs=pl.BlockSpec((tb, c), lambda b, l: (b, 0)),
            scratch_shapes=[
                pltpu.VMEM((tb, 1), jnp.float32),   # running max
                pltpu.VMEM((tb, 1), jnp.float32),   # running denominator
                pltpu.VMEM((tb, c), jnp.float32),   # rescaled weighted sum
            ],
        ),
        compiler_params=pltpu.CompilerParams(
            dimension_semantics=("parallel", "arbitrary"),
            vmem_limit_bytes=vmem_limit,
        ),
        cost_estimate=pl.CostEstimate(
            flops=flops,
            transcendentals=transcendentals,
            bytes_accessed=bytes_accessed,
        ),
    )(x3, w1m, b1m, w2m)
    return out


def _reference(x, w1, b1, w2, b2):
    n, c = x.shape[0], x.shape[1]
    x3 = x.reshape(n, c, -1).astype(jnp.float32)
    m = w1.shape[0]
    h = jnp.tanh(jnp.einsum("mc,ncl->nml",
                            w1.reshape(m, c).astype(jnp.float32), x3)
                 + b1.reshape(1, m, 1))
    s = jnp.einsum("m,nml->nl", w2.reshape(m).astype(jnp.float32), h)
    s = s + b2.reshape(1, 1)
    att = jax.nn.softmax(s, axis=1)                  # (N, L)
    return jnp.sum(x3 * att[:, None, :], axis=2)     # (N, C)


if __name__ == "__main__":
    key = jax.random.PRNGKey(0)
    kx, k1, k2, k3, k4, kx2 = jax.random.split(key, 6)

    # --- aligned shapes (the module's typical small demo) ---
    N, C, H, W = 2, 4, 16, 16
    M = 8  # middle_channels
    x = jax.random.normal(kx, (N, C, H, W), dtype=jnp.float32)
    # PyTorch Conv1d parameter shapes: (M, C, 1), (M,), (1, M, 1), (1,)
    w1 = 0.1 * jax.random.normal(k1, (M, C, 1), dtype=jnp.float32)
    b1 = 0.1 * jax.random.normal(k2, (M,), dtype=jnp.float32)
    w2 = 0.1 * jax.random.normal(k3, (1, M, 1), dtype=jnp.float32)
    b2 = 0.1 * jax.random.normal(k4, (1,), dtype=jnp.float32)

    out = jax.block_until_ready(soft_attention_pooling(x, w1, b1, w2, b2))
    ref = _reference(x, w1, b1, w2, b2)
    assert out.shape == (N, C)
    assert jnp.allclose(out, ref, atol=1e-4, rtol=1e-4), "mismatch (aligned)"

    # --- ragged shapes: exercise the batch-tail and L-tail mask paths ---
    N2, C2, H2, W2 = 10, 4, 5, 5            # N % 8 != 0, L = 25 (not mult of 128)
    x2 = jax.random.normal(kx2, (N2, C2, H2, W2), dtype=jnp.float32)
    out2 = jax.block_until_ready(soft_attention_pooling(x2, w1, b1, w2, b2))
    ref2 = _reference(x2, w1, b1, w2, b2)
    assert out2.shape == (N2, C2)
    assert jnp.all(jnp.isfinite(out2)), "non-finite values on ragged path"
    assert jnp.allclose(out2, ref2, atol=1e-4, rtol=1e-4), "mismatch (ragged)"

    print("KERNEL_OK")
</pallas_src>

<mosaic_0001>
module attributes {stable_mosaic.version = 11 : i64} {
  func.func @_soft_attention_pool_kernel(%arg0: i32, %arg1: i32, %arg2: memref<2x4x256xf32, #tpu.memory_space<vmem>>, %arg3: memref<8x4xf32, #tpu.memory_space<vmem>>, %arg4: memref<8x1xf32, #tpu.memory_space<vmem>>, %arg5: memref<8x1xf32, #tpu.memory_space<vmem>>, %arg6: memref<2x4xf32, #tpu.memory_space<vmem>>, %arg7: memref<2x1xf32, #tpu.memory_space<vmem>>, %arg8: memref<2x1xf32, #tpu.memory_space<vmem>>, %arg9: memref<2x4xf32, #tpu.memory_space<vmem>>) attributes {dimension_semantics = [#tpu.dimension_semantics<parallel>, #tpu.dimension_semantics<arbitrary>], iteration_bounds = array<i64: 1, 1>, scalar_prefetch = 0 : i64, scratch_operands = 3 : i64, tpu.core_type = #tpu.core_type<tc>, window_params = [{transform_indices = @transform_0, window_bounds = array<i64: 2, 4, 256>}, {pipeline_mode = #tpu.pipeline_mode<synchronous>, transform_indices = @transform_1, window_bounds = array<i64: 8, 4>}, {pipeline_mode = #tpu.pipeline_mode<synchronous>, transform_indices = @transform_2, window_bounds = array<i64: 8, 1>}, {pipeline_mode = #tpu.pipeline_mode<synchronous>, transform_indices = @transform_3, window_bounds = array<i64: 8, 1>}, {transform_indices = @transform_4, window_bounds = array<i64: 2, 4>}]} {
    %c0_i32 = arith.constant 0 : i32
    %0 = arith.cmpi eq, %arg1, %c0_i32 : i32
    %1 = arith.extui %0 : i1 to i32
    %c0_i32_0 = arith.constant 0 : i32
    %2 = arith.cmpi ne, %1, %c0_i32_0 : i32
    scf.if %2 {
      %cst_29 = arith.constant 0xFF800000 : f32
      %56 = vector.broadcast %cst_29 : f32 to vector<2x1xf32>
      %c0_30 = arith.constant 0 : index
      %c0_31 = arith.constant 0 : index
      %57 = vector.load %arg7[%c0_30, %c0_31] : memref<2x1xf32, #tpu.memory_space<vmem>>, vector<2x1xf32>
      tpu.vector_store %arg7[%c0_30, %c0_31], %56 {strides = array<i32>} : memref<2x1xf32, #tpu.memory_space<vmem>>, vector<2x1xf32>,
      %cst_32 = arith.constant 0.000000e+00 : f32
      %58 = vector.broadcast %cst_32 : f32 to vector<2x1xf32>
      %c0_33 = arith.constant 0 : index
      %c0_34 = arith.constant 0 : index
      %59 = vector.load %arg8[%c0_33, %c0_34] : memref<2x1xf32, #tpu.memory_space<vmem>>, vector<2x1xf32>
      tpu.vector_store %arg8[%c0_33, %c0_34], %58 {strides = array<i32>} : memref<2x1xf32, #tpu.memory_space<vmem>>, vector<2x1xf32>,
      %cst_35 = arith.constant 0.000000e+00 : f32
      %60 = vector.broadcast %cst_35 : f32 to vector<2x4xf32>
      %c0_36 = arith.constant 0 : index
      %c0_37 = arith.constant 0 : index
      %61 = vector.load %arg9[%c0_36, %c0_37] : memref<2x4xf32, #tpu.memory_space<vmem>>, vector<2x4xf32>
      tpu.vector_store %arg9[%c0_36, %c0_37], %60 {strides = array<i32>} : memref<2x4xf32, #tpu.memory_space<vmem>>, vector<2x4xf32>,
    } else {
    }
    %c0 = arith.constant 0 : index
    %c0_1 = arith.constant 0 : index
    %c0_2 = arith.constant 0 : index
    %3 = vector.load %arg2[%c0, %c0_1, %c0_2] : memref<2x4x256xf32, #tpu.memory_space<vmem>>, vector<2x4x256xf32>
    %c0_3 = arith.constant 0 : index
    %c0_4 = arith.constant 0 : index
    %4 = vector.load %arg3[%c0_3, %c0_4] : memref<8x4xf32, #tpu.memory_space<vmem>>, vector<8x4xf32>
    %c0_5 = arith.constant 0 : index
    %c0_6 = arith.constant 0 : index
    %5 = vector.load %arg4[%c0_5, %c0_6] : memref<8x1xf32, #tpu.memory_space<vmem>>, vector<8x1xf32>
    %c0_7 = arith.constant 0 : index
    %c0_8 = arith.constant 0 : index
    %6 = vector.load %arg5[%c0_7, %c0_8] : memref<8x1xf32, #tpu.memory_space<vmem>>, vector<8x1xf32>
    %7 = vector.extract_strided_slice %3 {offsets = [0, 0, 0], sizes = [1, 4, 256], strides = [1, 1, 1]} : vector<2x4x256xf32> to vector<1x4x256xf32>
    %8 = vector.shape_cast %7 : vector<1x4x256xf32> to vector<4x256xf32>
    %cst = arith.constant dense<0.000000e+00> : vector<8x256xf32>
    %9 = tpu.matmul %4, %8, %cst {dimension_numbers = #tpu.dot_dimension_numbers<[1], [0], [0], [1], [0, 0, 1, 1], [], []>} : vector<8x4xf32>, vector<4x256xf32>, vector<8x256xf32> -> vector<8x256xf32>
    %10 = vector.broadcast %5 : vector<8x1xf32> to vector<8x256xf32>
    %11 = arith.addf %9, %10 : vector<8x256xf32>
    %12 = math.tanh %11 : vector<8x256xf32>
    %13 = vector.broadcast %6 : vector<8x1xf32> to vector<8x256xf32>
    %14 = arith.mulf %12, %13 : vector<8x256xf32>
    %cst_9 = arith.constant dense<0.000000e+00> : vector<256xf32>
    %15 = vector.multi_reduction <add>, %14, %cst_9 [0] : vector<8x256xf32> to vector<256xf32>
    %16 = vector.shape_cast %15 : vector<256xf32> to vector<1x256xf32>
    %17 = vector.extract_strided_slice %3 {offsets = [1, 0, 0], sizes = [1, 4, 256], strides = [1, 1, 1]} : vector<2x4x256xf32> to vector<1x4x256xf32>
    %18 = vector.shape_cast %17 : vector<1x4x256xf32> to vector<4x256xf32>
    %cst_10 = arith.constant dense<0.000000e+00> : vector<8x256xf32>
    %19 = tpu.matmul %4, %18, %cst_10 {dimension_numbers = #tpu.dot_dimension_numbers<[1], [0], [0], [1], [0, 0, 1, 1], [], []>} : vector<8x4xf32>, vector<4x256xf32>, vector<8x256xf32> -> vector<8x256xf32>
    %20 = vector.broadcast %5 : vector<8x1xf32> to vector<8x256xf32>
    %21 = arith.addf %19, %20 : vector<8x256xf32>
    %22 = math.tanh %21 : vector<8x256xf32>
    %23 = vector.broadcast %6 : vector<8x1xf32> to vector<8x256xf32>
    %24 = arith.mulf %22, %23 : vector<8x256xf32>
    %cst_11 = arith.constant dense<0.000000e+00> : vector<256xf32>
    %25 = vector.multi_reduction <add>, %24, %cst_11 [0] : vector<8x256xf32> to vector<256xf32>
    %26 = vector.shape_cast %25 : vector<256xf32> to vector<1x256xf32>
    %27 = tpu.concatenate %16, %26 in 0 : vector<1x256xf32>, vector<1x256xf32> -> vector<2x256xf32>
    %c0_12 = arith.constant 0 : index
    %c0_13 = arith.constant 0 : index
    %28 = vector.load %arg7[%c0_12, %c0_13] : memref<2x1xf32, #tpu.memory_space<vmem>>, vector<2x1xf32>
    %cst_14 = arith.constant dense<0xFF800000> : vector<2xf32>
    %29 = vector.multi_reduction <maximumf>, %27, %cst_14 [1] : vector<2x256xf32> to vector<2xf32>
    %30 = vector.shape_cast %29 : vector<2xf32> to vector<2x1xf32>
    %31 = arith.maximumf %28, %30 : vector<2x1xf32>
    %32 = arith.subf %28, %31 : vector<2x1xf32>
    %33 = math.exp %32 : vector<2x1xf32>
    %34 = vector.broadcast %31 : vector<2x1xf32> to vector<2x256xf32>
    %35 = arith.subf %27, %34 : vector<2x256xf32>
    %36 = math.exp %35 : vector<2x256xf32>
    %c0_15 = arith.constant 0 : index
    %c0_16 = arith.constant 0 : index
    %37 = vector.load %arg8[%c0_15, %c0_16] : memref<2x1xf32, #tpu.memory_space<vmem>>, vector<2x1xf32>
    %38 = arith.mulf %33, %37 : vector<2x1xf32>
    %cst_17 = arith.constant dense<0.000000e+00> : vector<2xf32>
    %39 = vector.multi_reduction <add>, %36, %cst_17 [1] : vector<2x256xf32> to vector<2xf32>
    %40 = vector.shape_cast %39 : vector<2xf32> to vector<2x1xf32>
    %41 = arith.addf %38, %40 : vector<2x1xf32>
    %c0_18 = arith.constant 0 : index
    %c0_19 = arith.constant 0 : index
    %42 = vector.load %arg8[%c0_18, %c0_19] : memref<2x1xf32, #tpu.memory_space<vmem>>, vector<2x1xf32>
    tpu.vector_store %arg8[%c0_18, %c0_19], %41 {strides = array<i32>} : memref<2x1xf32, #tpu.memory_space<vmem>>, vector<2x1xf32>,
    %43 = vector.shape_cast %36 : vector<2x256xf32> to vector<2x1x256xf32>
    %44 = vector.broadcast %43 : vector<2x1x256xf32> to vector<2x4x256xf32>
    %45 = arith.mulf %3, %44 : vector<2x4x256xf32>
    %cst_20 = arith.constant dense<0.000000e+00> : vector<2x4xf32>
    %46 = vector.multi_reduction <add>, %45, %cst_20 [2] : vector<2x4x256xf32> to vector<2x4xf32>
    %c0_21 = arith.constant 0 : index
    %c0_22 = arith.constant 0 : index
    %47 = vector.load %arg9[%c0_21, %c0_22] : memref<2x4xf32, #tpu.memory_space<vmem>>, vector<2x4xf32>
    %48 = vector.broadcast %33 : vector<2x1xf32> to vector<2x4xf32>
    %49 = arith.mulf %48, %47 : vector<2x4xf32>
    %50 = arith.addf %49, %46 : vector<2x4xf32>
    %c0_23 = arith.constant 0 : index
    %c0_24 = arith.constant 0 : index
    %51 = vector.load %arg9[%c0_23, %c0_24] : memref<2x4xf32, #tpu.memory_space<vmem>>, vector<2x4xf32>
    tpu.vector_store %arg9[%c0_23, %c0_24], %50 {strides = array<i32>} : memref<2x4xf32, #tpu.memory_space<vmem>>, vector<2x4xf32>,
    %c0_25 = arith.constant 0 : index
    %c0_26 = arith.constant 0 : index
    %52 = vector.load %arg7[%c0_25, %c0_26] : memref<2x1xf32, #tpu.memory_space<vmem>>, vector<2x1xf32>
    tpu.vector_store %arg7[%c0_25, %c0_26], %31 {strides = array<i32>} : memref<2x1xf32, #tpu.memory_space<vmem>>, vector<2x1xf32>,
    %c0_i32_27 = arith.constant 0 : i32
    %53 = arith.cmpi eq, %arg1, %c0_i32_27 : i32
    %54 = arith.extui %53 : i1 to i32
    %c0_i32_28 = arith.constant 0 : i32
    %55 = arith.cmpi ne, %54, %c0_i32_28 : i32
    scf.if %55 {
      %c0_29 = arith.constant 0 : index
      %c0_30 = arith.constant 0 : index
      %56 = vector.load %arg9[%c0_29, %c0_30] : memref<2x4xf32, #tpu.memory_space<vmem>>, vector<2x4xf32>
      %c0_31 = arith.constant 0 : index
      %c0_32 = arith.constant 0 : index
      %57 = vector.load %arg8[%c0_31, %c0_32] : memref<2x1xf32, #tpu.memory_space<vmem>>, vector<2x1xf32>
      %58 = vector.broadcast %57 : vector<2x1xf32> to vector<2x4xf32>
      %59 = arith.divf %56, %58 : vector<2x4xf32>
      %c0_33 = arith.constant 0 : index
      %c0_34 = arith.constant 0 : index
      %60 = vector.load %arg6[%c0_33, %c0_34] : memref<2x4xf32, #tpu.memory_space<vmem>>, vector<2x4xf32>
      tpu.vector_store %arg6[%c0_33, %c0_34], %59 {strides = array<i32>} : memref<2x4xf32, #tpu.memory_space<vmem>>, vector<2x4xf32>,
    } else {
    }
    return
  }
  func.func @transform_0(%arg0: i32, %arg1: i32) -> (i32, i32, i32) {
    %c0_i32 = arith.constant 0 : i32
    %c0_i32_0 = arith.constant 0 : i32
    return %arg0, %c0_i32, %arg1 : i32, i32, i32
  }
  func.func @transform_1(%arg0: i32, %arg1: i32) -> (i32, i32) {
    %c0_i32 = arith.constant 0 : i32
    %c0_i32_0 = arith.constant 0 : i32
    %c0_i32_1 = arith.constant 0 : i32
    return %c0_i32, %c0_i32_0 : i32, i32
  }
  func.func @transform_2(%arg0: i32, %arg1: i32) -> (i32, i32) {
    %c0_i32 = arith.constant 0 : i32
    %c0_i32_0 = arith.constant 0 : i32
    %c0_i32_1 = arith.constant 0 : i32
    return %c0_i32, %c0_i32_0 : i32, i32
  }
  func.func @transform_3(%arg0: i32, %arg1: i32) -> (i32, i32) {
    %c0_i32 = arith.constant 0 : i32
    %c0_i32_0 = arith.constant 0 : i32
    %c0_i32_1 = arith.constant 0 : i32
    return %c0_i32, %c0_i32_0 : i32, i32
  }
  func.func @transform_4(%arg0: i32, %arg1: i32) -> (i32, i32) {
    %c0_i32 = arith.constant 0 : i32
    %c0_i32_0 = arith.constant 0 : i32
    return %arg0, %c0_i32 : i32, i32
  }
}

</mosaic_0001>

<llo_original>
// kernel: tpu_custom_call.1
$region0: #{tpu_custom_call.1}
  #allocation0 [shape = 'u32[]', space=smem, size = 0x4, offset = 0x4, fixed_abs, tag = 'smem constant byte address 0x4 - core index']
  #allocation1 [shape = 'u32[144,128]{1,0:T(1,128)}', space=vmem, size = 0x12000, scoped, tag = 'internal scratch']
  #allocation2 [shape = 'f32[2,1]{1,0:T(2,128)}', space=vmem, size = 0x400, scoped, tag = 'scratch operand']
  #allocation3 [shape = 'f32[2,1]{1,0:T(2,128)}', space=vmem, size = 0x400, scoped, tag = 'scratch operand']
  #allocation4 [shape = 'f32[2,4]{1,0:T(2,128)}', space=vmem, size = 0x400, scoped, tag = 'scratch operand']
  %s0 = inlined_call_operand.vmem [shape: f32[2,4,256], index: 0, kind: input, shape index: {}]
  %s1 = inlined_call_operand.vmem [shape: f32[8,4], index: 1, kind: input, shape index: {}]
  %s2 = inlined_call_operand.vmem [shape: f32[8,1], index: 2, kind: input, shape index: {}]
  %s3 = inlined_call_operand.vmem [shape: f32[8,1], index: 3, kind: input, shape index: {}]
  %s4 = inlined_call_operand.hbm [shape: f32[2,4], index: 4, kind: output, shape index: {}]
  %s5 = sld [smem:[#allocation0]]
  $region34: #{tpu_custom_call.1} parent=0
    _
  %s7 = ssub.s32 1, %s5
  %s8 = scalar_select 0, %s7, %s5
  $region1: #{tpu_custom_call.1} parent=0
    #allocation5 [shape = 'u8[1024]{0}', space=vmem, size = 0x400, scoped, tag = 'output window, operand 0, single buffered']
    #allocation6 [shape = 's32[1]{0}', space=sflag, size = 0x4, scoped, tag = 'scoped memory for tpu_custom_call.1']
    %9 = vsyncpa [#allocation6], 0
    // Predicated region
    $region2: #{tpu_custom_call.1} parent=1 // pred_check
      _
    $region3: #{tpu_custom_call.1} parent=1 // pred_check_branch
      %11 = sbr.rel (0) target = $region5
    $region4: #{tpu_custom_call.1} parent=1 // pred_region
      _
    $region5: #{tpu_custom_call.1} parent=1 // pred_fallthru
      _
    // Predicated region
    $region6: #{tpu_custom_call.1} parent=1 // pred_check
      _
    $region7: #{tpu_custom_call.1} parent=1 // pred_check_branch
      %13 = sbr.rel (0) target = $region9
    $region8: #{tpu_custom_call.1} parent=1 // pred_region
      _
    $region9: #{tpu_custom_call.1} parent=1 // pred_fallthru
      _
    // Predicated region
    $region10: #{tpu_custom_call.1} parent=1 // pred_check
      _
    $region11: #{tpu_custom_call.1} parent=1 // pred_check_branch
      %15 = sbr.rel (0) target = $region13
    $region12: #{tpu_custom_call.1} parent=1 // pred_region
      _
    $region13: #{tpu_custom_call.1} parent=1 // pred_fallthru
      _
    // Predicated region
    $region14: #{tpu_custom_call.1} parent=1 // pred_check
      _
    $region15: #{tpu_custom_call.1} parent=1 // pred_check_branch
      %17 = sbr.rel (0) target = $region17
    $region16: #{tpu_custom_call.1} parent=1 // pred_region
      _
    $region17: #{tpu_custom_call.1} parent=1 // pred_fallthru
      _
    %p18 = scmp.eq.s32.totalorder 0, 0
    // Predicated region
    $region18: #{tpu_custom_call.1} parent=1 // pred_check
      %p19 = pneg %p18
    $region19: #{tpu_custom_call.1} parent=1 // pred_check_branch
      %21 = sbr.rel (%p19) target = $region21
    $region20: #{tpu_custom_call.1} parent=1 // pred_region
      %vm22 = vcmask 1024
      %23 = vst.msk [vmem:[#allocation2] sm:$0x3] %vm22, -inf
      %24 = vst.msk [vmem:[#allocation3] sm:$0x3] %vm22, 0.0
      %vm25 = vcmask 25600
      %26 = vst.msk [vmem:[#allocation4] sm:$0x3] %vm25, 0.0
    $region21: #{tpu_custom_call.1} parent=1 // pred_fallthru
      _
    %v27 = vld [vmem:[%s0] sm:$0xff]
    %v28 = vld [vmem:[%s0 + $0x8] sm:$0xff]
    %v29 = vld [vmem:[%s1] sm:$0xff]
    %v30 = vld [vmem:[%s2] sm:$0xff]
    %v31 = vld [vmem:[%s3] sm:$0xff]
    %33 = vset.pattern.permute.xlu0 0
    %34 = vperm.xlu0 %33, %v30
    %v35 = vpop.permute.xlu0 %34
    %v38 = vcombine.high %v27, %v27
    %vm39 = vcmask 31744
    %v41 = vsel %vm39, %v29, 0
    %vm43 = vcmask 1043456
    %v44 = vsel %vm43, %v27, 0
    %v46 = vsel %vm43, %v38, 0
    %48 = vmatprep.subr.mxu0 %v46
    %49 = vmatpush1.msra.mxu0 %v44
    %50 = vmatprep.subr.mxu0 0.0
    %51 = vmatpush1.msra.mxu0 0.0
    %52 = vmatprep.subr.mxu0 0.0
    %53 = vmatpush1.msra.mxu0 0.0
    %54 = vmatprep.subr.mxu0 0.0
    %55 = vmatpush1.msra.mxu0 0.0
    %56 = vmatprep.subr.mxu0 0.0
    %57 = vmatpush1.msra.mxu0 0.0
    %58 = vmatprep.subr.mxu0 0.0
    %59 = vmatpush1.msra.mxu0 0.0
    %60 = vmatprep.subr.mxu0 0.0
    %61 = vmatpush1.msra.mxu0 0.0
    %62 = vmatprep.subr.mxu0 0.0
    %63 = vmatpush1.msra.mxu0 0.0
    %64 = vmatprep.subr.mxu0 0.0
    %65 = vmatpush1.msra.mxu0 0.0
    %66 = vmatprep.subr.mxu0 0.0
    %67 = vmatpush1.msra.mxu0 0.0
    %68 = vmatprep.subr.mxu0 0.0
    %69 = vmatpush1.msra.mxu0 0.0
    %70 = vmatprep.subr.mxu0 0.0
    %71 = vmatpush1.msra.mxu0 0.0
    %72 = vmatprep.subr.mxu0 0.0
    %73 = vmatpush1.msra.mxu0 0.0
    %74 = vmatprep.subr.mxu0 0.0
    %75 = vmatpush1.msra.mxu0 0.0
    %76 = vmatprep.subr.mxu0 0.0
    %77 = vmatpush1.msra.mxu0 0.0
    %78 = vmatprep.subr.mxu0 0.0
    %79 = vmatpush1.msra.mxu0 0.0
    %80 = vmatprep.subr.mxu0 0.0
    %81 = vmatpush1.msra.mxu0 0.0
    %82 = vmatprep.subr.mxu0 0.0
    %83 = vmatpush1.msra.mxu0 0.0
    %84 = vmatprep.subr.mxu0 0.0
    %85 = vmatpush1.msra.mxu0 0.0
    %86 = vmatprep.subr.mxu0 0.0
    %87 = vmatpush1.msra.mxu0 0.0
    %88 = vmatprep.subr.mxu0 0.0
    %89 = vmatpush1.msra.mxu0 0.0
    %90 = vmatprep.subr.mxu0 0.0
    %91 = vmatpush1.msra.mxu0 0.0
    %92 = vmatprep.subr.mxu0 0.0
    %93 = vmatpush1.msra.mxu0 0.0
    %94 = vmatprep.subr.mxu0 0.0
    %95 = vmatpush1.msra.mxu0 0.0
    %96 = vmatprep.subr.mxu0 0.0
    %97 = vmatpush1.msra.mxu0 0.0
    %98 = vmatprep.subr.mxu0 0.0
    %99 = vmatpush1.msra.mxu0 0.0
    %100 = vmatprep.subr.mxu0 0.0
    %101 = vmatpush1.msra.mxu0 0.0
    %102 = vmatprep.subr.mxu0 0.0
    %103 = vmatpush1.msra.mxu0 0.0
    %104 = vmatprep.subr.mxu0 0.0
    %105 = vmatpush1.msra.mxu0 0.0
    %106 = vmatprep.subr.mxu0 0.0
    %107 = vmatpush1.msra.mxu0 0.0
    %108 = vmatprep.subr.mxu0 0.0
    %109 = vmatpush1.msra.mxu0 0.0
    %110 = vmatprep.subr.mxu0 0.0
    %111 = vmatpush1.msra.mxu0 0.0
    %112 = vmatprep.mubr.f32.mxu0 0.0
    %113 = vmatmul.mubr.f32.gmra.mrb[0].mxu0 %v41
    %v114 = vpop.f32.mrb[0].mxu0
    %v115 = vadd.f32 %v35, %v114
    %v116 = vpop.f32.mrb[0].mxu0
    %v117 = vadd.f32 %v35, %v116
    %118 = vdwg.mxu0
    %v119 = vtanh.pop %v115
    %v120 = vtanh.pop %v117
    %122 = vset.pattern.permute.xlu0 0
    %123 = vperm.xlu0 %122, %v31
    %v124 = vpop.permute.xlu0 %123
    %v126 = vmul.f32 %v119, %v124
    %v127 = vmul.f32 %v120, %v124
    %v128 = vrot.slane %v126, 4
    %v129 = vadd.f32 %v126, %v128
    %v130 = vrot.slane %v129, 2
    %v131 = vadd.f32 %v129, %v130
    %v132 = vrot.slane %v131, 1
    %v133 = vadd.f32 %v131, %v132
    %v134 = vrot.slane %v127, 4
    %v135 = vadd.f32 %v127, %v134
    %v136 = vrot.slane %v135, 2
    %v137 = vadd.f32 %v135, %v136
    %v138 = vrot.slane %v137, 1
    %v139 = vadd.f32 %v137, %v138
    %v141 = vcombine.high %v28, %v28
    %v142 = vsel %vm43, %v28, 0
    %v144 = vsel %vm43, %v141, 0
    %146 = vmatprep.subr.mxu0 %v144
    %147 = vmatpush1.msra.mxu0 %v142
    %148 = vmatprep.subr.mxu0 0.0
    %149 = vmatpush1.msra.mxu0 0.0
    %150 = vmatprep.subr.mxu0 0.0
    %151 = vmatpush1.msra.mxu0 0.0
    %152 = vmatprep.subr.mxu0 0.0
    %153 = vmatpush1.msra.mxu0 0.0
    %154 = vmatprep.subr.mxu0 0.0
    %155 = vmatpush1.msra.mxu0 0.0
    %156 = vmatprep.subr.mxu0 0.0
    %157 = vmatpush1.msra.mxu0 0.0
    %158 = vmatprep.subr.mxu0 0.0
    %159 = vmatpush1.msra.mxu0 0.0
    %160 = vmatprep.subr.mxu0 0.0
    %161 = vmatpush1.msra.mxu0 0.0
    %162 = vmatprep.subr.mxu0 0.0
    %163 = vmatpush1.msra.mxu0 0.0
    %164 = vmatprep.subr.mxu0 0.0
    %165 = vmatpush1.msra.mxu0 0.0
    %166 = vmatprep.subr.mxu0 0.0
    %167 = vmatpush1.msra.mxu0 0.0
    %168 = vmatprep.subr.mxu0 0.0
    %169 = vmatpush1.msra.mxu0 0.0
    %170 = vmatprep.subr.mxu0 0.0
    %171 = vmatpush1.msra.mxu0 0.0
    %172 = vmatprep.subr.mxu0 0.0
    %173 = vmatpush1.msra.mxu0 0.0
    %174 = vmatprep.subr.mxu0 0.0
    %175 = vmatpush1.msra.mxu0 0.0
    %176 = vmatprep.subr.mxu0 0.0
    %177 = vmatpush1.msra.mxu0 0.0
    %178 = vmatprep.subr.mxu0 0.0
    %179 = vmatpush1.msra.mxu0 0.0
    %180 = vmatprep.subr.mxu0 0.0
    %181 = vmatpush1.msra.mxu0 0.0
    %182 = vmatprep.subr.mxu0 0.0
    %183 = vmatpush1.msra.mxu0 0.0
    %184 = vmatprep.subr.mxu0 0.0
    %185 = vmatpush1.msra.mxu0 0.0
    %186 = vmatprep.subr.mxu0 0.0
    %187 = vmatpush1.msra.mxu0 0.0
    %188 = vmatprep.subr.mxu0 0.0
    %189 = vmatpush1.msra.mxu0 0.0
    %190 = vmatprep.subr.mxu0 0.0
    %191 = vmatpush1.msra.mxu0 0.0
    %192 = vmatprep.subr.mxu0 0.0
    %193 = vmatpush1.msra.mxu0 0.0
    %194 = vmatprep.subr.mxu0 0.0
    %195 = vmatpush1.msra.mxu0 0.0
    %196 = vmatprep.subr.mxu0 0.0
    %197 = vmatpush1.msra.mxu0 0.0
    %198 = vmatprep.subr.mxu0 0.0
    %199 = vmatpush1.msra.mxu0 0.0
    %200 = vmatprep.subr.mxu0 0.0
    %201 = vmatpush1.msra.mxu0 0.0
    %202 = vmatprep.subr.mxu0 0.0
    %203 = vmatpush1.msra.mxu0 0.0
    %204 = vmatprep.subr.mxu0 0.0
    %205 = vmatpush1.msra.mxu0 0.0
    %206 = vmatprep.subr.mxu0 0.0
    %207 = vmatpush1.msra.mxu0 0.0
    %208 = vmatprep.subr.mxu0 0.0
    %209 = vmatpush1.msra.mxu0 0.0
    %210 = vmatprep.mubr.f32.mxu0 0.0
    %211 = vmatmul.mubr.f32.gmra.mrb[0].mxu0 %v41
    %v212 = vpop.f32.mrb[0].mxu0
    %v213 = vadd.f32 %v35, %v212
    %v214 = vpop.f32.mrb[0].mxu0
    %v215 = vadd.f32 %v35, %v214
    %216 = vdwg.mxu0
    %v217 = vtanh.pop %v213
    %v218 = vtanh.pop %v215
    %v219 = vmul.f32 %v217, %v124
    %v220 = vmul.f32 %v218, %v124
    %v221 = vrot.slane %v219, 4
    %v222 = vadd.f32 %v219, %v221
    %v223 = vrot.slane %v222, 2
    %v224 = vadd.f32 %v222, %v223
    %v225 = vrot.slane %v224, 1
    %v226 = vadd.f32 %v224, %v225
    %v227 = vrot.slane %v220, 4
    %v228 = vadd.f32 %v220, %v227
    %v229 = vrot.slane %v228, 2
    %v230 = vadd.f32 %v228, %v229
    %v231 = vrot.slane %v230, 1
    %v232 = vadd.f32 %v230, %v231
    %vm233 = vcmask 1040384
    %v234 = vsel %vm233, %v133, %v226
    %v235 = vsel %vm233, %v139, %v232
    %v236 = vld [vmem:[#allocation2] sm:$0x3]
    %vm237 = vcmask 1041408
    %v238 = vsel %vm237, %v234, -inf
    %v239 = vsel %vm237, %v235, -inf
    %v240 = vmax.f32 %v238, %v239
    %241 = vmax.xlane.f32.xlu0 %v240
    %v242 = vpop.xlane.xlu0 %241
    %v243 = vmax.f32 %v236, %v242
    %v244 = vsub.f32 %v236, %v243
    %v245 = vmul.f32 %v244, 1.442695
    %v246 = vpow.pop %v245
    %248 = vset.pattern.permute.xlu0 0
    %249 = vperm.xlu0 %248, %v243
    %v250 = vpop.permute.xlu0 %249
    %v252 = vsub.f32 %v234, %v250
    %v253 = vsub.f32 %v235, %v250
    %v254 = vmul.f32 %v252, 1.442695
    %v255 = vpow.pop %v254
    %v256 = vmul.f32 %v253, 1.442695
    %v257 = vpow.pop %v256
    %v258 = vld [vmem:[#allocation3] sm:$0x3]
    %v259 = vmul.f32 %v246, %v258
    %v260 = vsel %vm237, %v255, 0.0
    %v261 = vsel %vm237, %v257, 0.0
    %v262 = vadd.f32 %v260, %v261
    %263 = vadd.xlane.f32.xlu0 %v262
    %v264 = vpop.xlane.xlu0 %263
    %v265 = vadd.f32 %v259, %v264
    %vm266 = vcmask 1024
    %267 = vst.msk [vmem:[#allocation3] sm:$0x3] %vm266, %v265
    %v270 = vcombine.low %v255, %v257
    %v272 = vunpack.c.l.s4 1966171168
    %v273 = vunpack.c.0.s8 %v272
    %v274 = vlaneseq
    %v275 = vshrl.u32 %v274, 7
    %v276 = vsub.s32 %v273, %v275
    %v277 = vrot.slane %v270, %v276
    %v278 = vcombine.high %v277, %v277
    %v280 = vunpack.c.l.s4 1966171168
    %v281 = vunpack.c.0.s8 %v280
    %v282 = vlaneseq
    %v283 = vshrl.u32 %v282, 7
    %v284 = vsub.s32 %v281, %v283
    %v285 = vrot.slane %v277, %v284
    %v287 = vunpack.c.l.s4 1966171168
    %v288 = vunpack.c.0.s8 %v287
    %v289 = vlaneseq
    %v290 = vshrl.u32 %v289, 7
    %v291 = vsub.s32 %v288, %v290
    %v292 = vrot.slane %v278, %v291
    %v293 = vlaneseq
    %v294 = vshrl.u32 %v293, 7
    %v295 = vsub.s32 0, %v294
    %v296 = vrot.slane %v285, %v295
    %v297 = vlaneseq
    %v298 = vshrl.u32 %v297, 7
    %v299 = vsub.s32 1, %v298
    %v300 = vrot.slane %v285, %v299
    %v301 = vlaneseq
    %v302 = vshrl.u32 %v301, 7
    %v303 = vsub.s32 0, %v302
    %v304 = vrot.slane %v292, %v303
    %v305 = vlaneseq
    %v306 = vshrl.u32 %v305, 7
    %v307 = vsub.s32 1, %v306
    %v308 = vrot.slane %v292, %v307
    %v309 = vcombine.low %v296, %v300
    %v310 = vcombine.low %v304, %v308
    %v313 = vmul.f32 %v27, %v309
    %v314 = vmul.f32 %v28, %v310
    %v317 = vcombine.high %v313, %v313
    %v318 = vcombine.high %v314, %v314
    %v321 = vsel %vm43, %v313, 0.0
    %v322 = vsel %vm43, %v317, 0.0
    %v323 = vadd.f32 %v321, %v322
    %324 = vadd.xlane.f32.xlu0 %v323
    %v325 = vpop.xlane.xlu0 %324
    %v326 = vsel %vm43, %v314, 0.0
    %v327 = vsel %vm43, %v318, 0.0
    %v328 = vadd.f32 %v326, %v327
    %329 = vadd.xlane.f32.xlu0 %v328
    %v330 = vpop.xlane.xlu0 %329
    %v331 = vld [vmem:[#allocation4] sm:$0x3]
    %333 = vset.pattern.permute.xlu0 0
    %334 = vperm.xlu0 %333, %v246
    %v335 = vpop.permute.xlu0 %334
    %v337 = vmul.f32 %v335, %v331
    %v340 = vlaneseq
    %v341 = vand.u32 %v340, 127
    %v342 = vlaneseq
    %v343 = vshrl.u32 %v342, 7
    %v344 = vsub.s32 %v341, %v343
    %v345 = vrot.slane %v325, %v344
    %v346 = vlaneseq
    %v347 = vshrl.u32 %v346, 7
    %v348 = vsub.s32 %v341, %v347
    %v349 = vrot.slane %v330, %v348
    %vm350 = vcmask 1041409
    %v351 = vsel %vm350, %v349, %v345
    %v353 = vadd.f32 %v337, %v351
    %vm354 = vcmask 25600
    %355 = vst.msk [vmem:[#allocation4] sm:$0x3] %vm354, %v353
    %356 = vst.msk [vmem:[#allocation2] sm:$0x3] %vm266, %v243
    // Predicated region
    $region22: #{tpu_custom_call.1} parent=1 // pred_check
      %p357 = pneg %p18
    $region23: #{tpu_custom_call.1} parent=1 // pred_check_branch
      %359 = sbr.rel (%p357) target = $region25
    $region24: #{tpu_custom_call.1} parent=1 // pred_region
      %v360 = vld [vmem:[#allocation4] sm:$0x3]
      %v361 = vld [vmem:[#allocation3] sm:$0x3]
      %363 = vset.pattern.permute.xlu0 0
      %364 = vperm.xlu0 %363, %v361
      %v365 = vpop.permute.xlu0 %364
      %v367 = vrcp.pop %v365
      %v368 = vmul.f32 %v360, %v367
      %369 = vst.msk [vmem:[#allocation5] sm:$0x3] %vm354, %v368
    $region25: #{tpu_custom_call.1} parent=1 // pred_fallthru
      _
    // Predicated region
    $region26: #{tpu_custom_call.1} parent=1 // pred_check
      _
    $region27: #{tpu_custom_call.1} parent=1 // pred_check_branch
      %371 = sbr.rel (0) target = $region29
    $region28: #{tpu_custom_call.1} parent=1 // pred_region
      %s373 = ssub.s32 32, 32
      %374 = vsyncadd [#allocation6], %s373
      %s376 = sshll.u32 [#allocation5], 4
      %s377 = int_to_ptr.vmem [resolvable:$true] %s376
      %379 = dma.vmem_to_hbm [thread:$0]  %s377, 32, %s4, [#allocation6]
    $region29: #{tpu_custom_call.1} parent=1 // pred_fallthru
      _
    // Predicated region
    $region30: #{tpu_custom_call.1} parent=1 // pred_check
      _
    $region31: #{tpu_custom_call.1} parent=1 // pred_check_branch
      %381 = sbr.rel (0) target = $region33
    $region32: #{tpu_custom_call.1} parent=1 // pred_region
      %382 = dma.done [#allocation6], 32
    $region33: #{tpu_custom_call.1} parent=1 // pred_fallthru
      _
    %383 = vsyncpa [#allocation6], 1

</llo_original>
